<compile_context>
chip_gen: v7x
topology: tpu7x:2x2x1
jax: 0.10.0
libtpu: 0.0.40
codegen_flags: <defaults>
</compile_context>

<pallas_src>
import functools

import jax
import jax.numpy as jnp
from jax import lax
from jax.experimental import pallas as pl
from jax.experimental.pallas import tpu as pltpu


_LANE = 128
_SUBLANE = 8

# Per-grid-step transient VMEM budget used to derive tile_n.
_TILE_VMEM_BUDGET = 12 * 1024 * 1024
# Resident-table budget (double-buffered) under which the fused in-kernel
# one-hot gather path is used.
_RESIDENT_TABLE_BUDGET = 8 * 1024 * 1024
# Padded entity-table width above which the one-hot construction cost would
# dominate; beyond this, fall back to the pre-gathered path.
_MAX_ONEHOT_ROWS = 4096
_MAX_TILE_N = 8192


def _round_up(x, m):
    return ((x + m - 1) // m) * m


def _ceil_div(a, b):
    return -(-a // b)


def _pick_tiling(n, per_sample_bytes, max_tile_n):
    """Pick (tile_n, n_pad): tile as large as the VMEM budget allows, but
    bounded by the actual N so small / ragged batches don't pad to a huge tile."""
    cap = _TILE_VMEM_BUDGET // max(per_sample_bytes, 1)
    cap = max(_LANE, min(max_tile_n, (cap // _LANE) * _LANE))
    num_tiles = _ceil_div(n, cap)
    tile_n = _round_up(_ceil_div(n, num_tiles), _LANE)
    return tile_n, tile_n * num_tiles


def _vmem_limit(tile_n, per_sample_bytes, resident_bytes):
    """Footprint-derived scoped-VMEM limit, capped at 48 MiB (v7x-safe)."""
    est = tile_n * per_sample_bytes + 2 * resident_bytes + (4 << 20)
    return int(min(max(est, 32 << 20), 48 << 20))


# ----------------------------------------------------------------------------
# Shared score math (reductions-first TransH)
# ----------------------------------------------------------------------------
def _score_from_embeds(h, t, r, w, p):
    """h/t/r/w: [D_pad, TN] float32 (zero-padded rows are harmless).

    Computes || t_n - h_n - r_n - ((w_n.t_n) - (w_n.h_n)) w_n ||_p per lane,
    with x_n = x / max(||x||_2, 1e-12), without materializing any normalized /
    projected [D_pad, TN] temporaries: only the inputs and one combined `d`
    stay live besides [1, TN] rows.
    """
    eps2 = jnp.float32(1e-24)  # (1e-12)^2; rsqrt(max(ssq, eps2)) == 1/max(||x||, 1e-12)

    ssq_h = jnp.sum(h * h, axis=0, keepdims=True)        # [1, TN]
    ssq_t = jnp.sum(t * t, axis=0, keepdims=True)
    ssq_r = jnp.sum(r * r, axis=0, keepdims=True)
    ssq_w = jnp.sum(w * w, axis=0, keepdims=True)
    wh = jnp.sum(w * h, axis=0, keepdims=True)
    wt = jnp.sum(w * t, axis=0, keepdims=True)

    inv_h = lax.rsqrt(jnp.maximum(ssq_h, eps2))          # EUP rsqrt on [1, TN] rows
    inv_t = lax.rsqrt(jnp.maximum(ssq_t, eps2))
    inv_r = lax.rsqrt(jnp.maximum(ssq_r, eps2))
    inv_w = lax.rsqrt(jnp.maximum(ssq_w, eps2))

    # d = t_proj - h_proj - r_n  ==  a_t*t + a_h*h + a_r*r + a_w*w
    a_t = inv_t
    a_h = -inv_h
    a_r = -inv_r
    a_w = -(wt * inv_t - wh * inv_h) * (inv_w * inv_w)

    d = t * a_t + h * a_h + r * a_r + w * a_w            # [D_pad, TN]

    if p == 1:
        return jnp.sum(jnp.abs(d), axis=0, keepdims=True)
    elif p == 2:
        return jnp.sqrt(jnp.sum(d * d, axis=0, keepdims=True))
    else:
        pf = jnp.float32(p)
        return jnp.power(
            jnp.sum(jnp.power(jnp.abs(d), pf), axis=0, keepdims=True),
            jnp.float32(1.0) / pf)


# ----------------------------------------------------------------------------
# Fused kernel: in-kernel one-hot MXU gather + TransH score
# ----------------------------------------------------------------------------
def _transh_fused_kernel(hidx_ref, tidx_ref, ridx_ref, ent_ref, rw_ref, o_ref,
                         *, p, d_pad):
    """hidx/tidx/ridx: [1, TN] int32; ent_ref: [D_pad, E_pad];
    rw_ref: [2*D_pad, R_pad] (rel rows stacked on proj rows); o_ref: [1, TN] f32."""
    e_pad = ent_ref.shape[1]
    r_pad = rw_ref.shape[1]
    tn = hidx_ref.shape[1]
    table_dt = ent_ref.dtype

    ent = ent_ref[...]
    rw_tab = rw_ref[...]

    # One-hot gather on the MXU: table[D, K] @ onehot[K, TN] -> [D, TN].
    iota_e = lax.broadcasted_iota(jnp.int32, (e_pad, tn), 0)
    iota_r = lax.broadcasted_iota(jnp.int32, (r_pad, tn), 0)
    oh_h = (iota_e == hidx_ref[...]).astype(table_dt)    # [E_pad, TN]
    oh_t = (iota_e == tidx_ref[...]).astype(table_dt)
    oh_r = (iota_r == ridx_ref[...]).astype(table_dt)    # [R_pad, TN]

    h = jnp.dot(ent, oh_h, preferred_element_type=jnp.float32)       # [D_pad, TN]
    t = jnp.dot(ent, oh_t, preferred_element_type=jnp.float32)
    rw = jnp.dot(rw_tab, oh_r, preferred_element_type=jnp.float32)   # [2*D_pad, TN]

    o_ref[...] = _score_from_embeds(h, t, rw[:d_pad, :], rw[d_pad:, :], p)


def _transh_fused_call(hidx, tidx, ridx, ent_t, rw_t, *, p, tile_n, vmem_limit):
    n_pad = hidx.shape[1]
    d_pad, e_pad = ent_t.shape
    r_pad = rw_t.shape[1]
    grid = (n_pad // tile_n,)

    idx_spec = pl.BlockSpec((1, tile_n), lambda i: (0, i))
    ent_spec = pl.BlockSpec((d_pad, e_pad), lambda i: (0, 0))      # VMEM-resident
    rw_spec = pl.BlockSpec((2 * d_pad, r_pad), lambda i: (0, 0))   # VMEM-resident
    out_spec = pl.BlockSpec((1, tile_n), lambda i: (0, i))

    out = pl.pallas_call(
        functools.partial(_transh_fused_kernel, p=p, d_pad=d_pad),
        out_shape=jax.ShapeDtypeStruct((1, n_pad), jnp.float32),
        grid_spec=pltpu.PrefetchScalarGridSpec(
            num_scalar_prefetch=0,
            grid=grid,
            in_specs=[idx_spec, idx_spec, idx_spec, ent_spec, rw_spec],
            out_specs=out_spec,
        ),
        compiler_params=pltpu.CompilerParams(
            # Per-sample work is independent; "parallel" lets v7x shard the N
            # grid across both TensorCores (no-op on single-TC v5e/v6e).
            # TODO(synk): verify 2-TC sharding on v7x; switch the axis to
            # pltpu.CORE_PARALLEL if plain "parallel" keeps it on one core.
            dimension_semantics=("parallel",),
            vmem_limit_bytes=vmem_limit,
        ),
    )(hidx, tidx, ridx, ent_t, rw_t)
    return out[0]


# ----------------------------------------------------------------------------
# Fallback kernel: pre-gathered lane-dense [D_pad, TILE_N] embeddings
# ----------------------------------------------------------------------------
def _transh_pregathered_kernel(h_ref, t_ref, rw_ref, o_ref, *, p, d_pad):
    h = h_ref[...].astype(jnp.float32)
    t = t_ref[...].astype(jnp.float32)
    rw = rw_ref[...].astype(jnp.float32)
    o_ref[...] = _score_from_embeds(h, t, rw[:d_pad, :], rw[d_pad:, :], p)


def _transh_pregathered_call(h_t, t_t, rw_g, *, p, d_pad, tile_n, vmem_limit):
    n_pad = h_t.shape[1]
    grid = (n_pad // tile_n,)
    emb_spec = pl.BlockSpec((d_pad, tile_n), lambda i: (0, i))
    rw_spec = pl.BlockSpec((2 * d_pad, tile_n), lambda i: (0, i))
    out_spec = pl.BlockSpec((1, tile_n), lambda i: (0, i))

    out = pl.pallas_call(
        functools.partial(_transh_pregathered_kernel, p=p, d_pad=d_pad),
        out_shape=jax.ShapeDtypeStruct((1, n_pad), jnp.float32),
        grid_spec=pltpu.PrefetchScalarGridSpec(
            num_scalar_prefetch=0,
            grid=grid,
            in_specs=[emb_spec, emb_spec, rw_spec],
            out_specs=out_spec,
        ),
        compiler_params=pltpu.CompilerParams(
            dimension_semantics=("parallel",),
            vmem_limit_bytes=vmem_limit,
        ),
    )(h_t, t_t, rw_g)
    return out[0]


# ----------------------------------------------------------------------------
# TransHModule equivalent (synthetic parameters, deterministic init)
# ----------------------------------------------------------------------------
class TransHModuleJAX:
    def __init__(self, n_ent, n_rel, hidden_dim, p=1,
                 table_dtype=jnp.float32, max_tile_n=_MAX_TILE_N,
                 force_pregathered=False, key=None):
        self.n_ent = n_ent
        self.n_rel = n_rel
        self.hidden_dim = hidden_dim
        self.p = p
        self.max_tile_n = max_tile_n
        self.table_dtype = jnp.dtype(table_dtype)

        self.d_pad = _round_up(hidden_dim, _SUBLANE)
        self.e_pad = _round_up(n_ent, _LANE)
        self.r_pad = _round_up(n_rel, _LANE)

        if key is None:
            key = jax.random.PRNGKey(0)
        k_ent, k_rel, k_proj = jax.random.split(key, 3)
        # xavier_uniform on an (n, hidden) embedding weight: U(-a, a),
        # a = sqrt(6 / (n + hidden)).
        a_ent = (6.0 / (n_ent + hidden_dim)) ** 0.5
        a_rel = (6.0 / (n_rel + hidden_dim)) ** 0.5
        ent = jax.random.uniform(k_ent, (n_ent, hidden_dim), jnp.float32, -a_ent, a_ent)
        rel = jax.random.uniform(k_rel, (n_rel, hidden_dim), jnp.float32, -a_rel, a_rel)
        proj = jax.random.uniform(k_proj, (n_rel, hidden_dim), jnp.float32, -a_rel, a_rel)

        ent_q = ent.astype(self.table_dtype)
        rel_q = rel.astype(self.table_dtype)
        proj_q = proj.astype(self.table_dtype)
        # What the kernel numerically sees, upcast to f32 (for the reference).
        self._ent_f32 = ent_q.astype(jnp.float32)
        self._rel_f32 = rel_q.astype(jnp.float32)
        self._proj_f32 = proj_q.astype(jnp.float32)

        dr = self.d_pad - hidden_dim
        # Fused-gather layout: transposed, zero-padded tables ([D_pad, K_pad]).
        self.ent_t = jnp.pad(ent_q.T, ((0, dr), (0, self.e_pad - n_ent)))
        rel_t = jnp.pad(rel_q.T, ((0, dr), (0, self.r_pad - n_rel)))
        proj_t = jnp.pad(proj_q.T, ((0, dr), (0, self.r_pad - n_rel)))
        self.rw_t = jnp.concatenate([rel_t, proj_t], axis=0)          # [2*D_pad, R_pad]

        # Fallback layout: row-major tables for contiguous XLA row gathers.
        self.ent_rows = jnp.pad(ent_q, ((0, 0), (0, dr)))              # [n_ent, D_pad]
        self.rw_rows = jnp.concatenate(
            [jnp.pad(rel_q, ((0, 0), (0, dr))),
             jnp.pad(proj_q, ((0, 0), (0, dr)))], axis=1)              # [n_rel, 2*D_pad]

        resident = (self.ent_t.size * self.ent_t.dtype.itemsize
                    + self.rw_t.size * self.rw_t.dtype.itemsize)
        self._resident_bytes = int(resident)
        self.use_fused = ((not force_pregathered)
                          and 2 * self._resident_bytes <= _RESIDENT_TABLE_BUDGET
                          and self.e_pad <= _MAX_ONEHOT_ROWS)

    # -- forward -------------------------------------------------------------
    def forward(self, head, tail, rela):
        shape = head.shape
        head_f = jnp.asarray(head).reshape(-1).astype(jnp.int32)
        tail_f = jnp.asarray(tail).reshape(-1).astype(jnp.int32)
        rela_f = jnp.asarray(rela).reshape(-1).astype(jnp.int32)
        n = head_f.shape[0]

        if self.use_fused:
            score = self._forward_fused(head_f, tail_f, rela_f, n)
        else:
            score = self._forward_pregathered(head_f, tail_f, rela_f, n)
        return score[:n].reshape(shape)

    def _forward_fused(self, head_f, tail_f, rela_f, n):
        itemsize = self.table_dtype.itemsize
        # Conservative transient bytes per sample inside one grid step:
        # one-hots + gathered f32 embeddings + d + a handful of [1, TN] rows.
        per_sample = ((2 * self.e_pad + self.r_pad) * itemsize
                      + 5 * self.d_pad * 4 + 96)
        tile_n, n_pad = _pick_tiling(n, per_sample, self.max_tile_n)
        pad = n_pad - n
        if pad:
            head_f = jnp.pad(head_f, (0, pad))   # padded slots reuse index 0
            tail_f = jnp.pad(tail_f, (0, pad))
            rela_f = jnp.pad(rela_f, (0, pad))
        hidx = head_f.reshape(1, n_pad)
        tidx = tail_f.reshape(1, n_pad)
        ridx = rela_f.reshape(1, n_pad)
        vmem_limit = _vmem_limit(tile_n, per_sample, self._resident_bytes)
        return _transh_fused_call(hidx, tidx, ridx, self.ent_t, self.rw_t,
                                  p=self.p, tile_n=tile_n, vmem_limit=vmem_limit)

    def _forward_pregathered(self, head_f, tail_f, rela_f, n):
        itemsize = self.table_dtype.itemsize
        # Streamed inputs (double-buffered) + f32 temporaries.
        per_sample = 4 * self.d_pad * itemsize * 2 + 6 * self.d_pad * 4 + 96
        tile_n, n_pad = _pick_tiling(n, per_sample, self.max_tile_n)
        pad = n_pad - n
        if pad:
            head_f = jnp.pad(head_f, (0, pad))
            tail_f = jnp.pad(tail_f, (0, pad))
            rela_f = jnp.pad(rela_f, (0, pad))
        # Contiguous row gathers from the row-major tables (glue, plain JAX);
        # one gather covers both rel and proj; one transpose each to the
        # lane-dense [D_pad, N_pad] kernel layout.
        h_t = jnp.take(self.ent_rows, head_f, axis=0).T        # [D_pad, N_pad]
        t_t = jnp.take(self.ent_rows, tail_f, axis=0).T
        rw_g = jnp.take(self.rw_rows, rela_f, axis=0).T        # [2*D_pad, N_pad]
        vmem_limit = _vmem_limit(tile_n, per_sample, 0)
        return _transh_pregathered_call(h_t, t_t, rw_g, p=self.p,
                                        d_pad=self.d_pad, tile_n=tile_n,
                                        vmem_limit=vmem_limit)

    # TransH: score == dist == forward.
    def score(self, head, tail, rela):
        return self.forward(head, tail, rela)

    def dist(self, head, tail, rela):
        return self.forward(head, tail, rela)


# ----------------------------------------------------------------------------
# Pure-JAX reference (PyTorch-faithful formulation, for a sanity check)
# ----------------------------------------------------------------------------
def _reference_forward(model, head, tail, rela):
    shape = head.shape

    def norm(x):
        return x / jnp.maximum(jnp.linalg.norm(x, axis=-1, keepdims=True), 1e-12)

    h = norm(jnp.take(model._ent_f32, head.reshape(-1), axis=0))
    t = norm(jnp.take(model._ent_f32, tail.reshape(-1), axis=0))
    r = norm(jnp.take(model._rel_f32, rela.reshape(-1), axis=0))
    w = norm(jnp.take(model._proj_f32, rela.reshape(-1), axis=0))
    h_p = h - jnp.sum(w * h, axis=-1, keepdims=True) * w
    t_p = t - jnp.sum(w * t, axis=-1, keepdims=True) * w
    d = t_p - h_p - r
    if model.p == 1:
        s = jnp.sum(jnp.abs(d), axis=-1)
    elif model.p == 2:
        s = jnp.sqrt(jnp.sum(d * d, axis=-1))
    else:
        s = jnp.power(jnp.sum(jnp.power(jnp.abs(d), float(model.p)), axis=-1),
                      1.0 / model.p)
    return s.reshape(shape)


if __name__ == "__main__":
    n_ent, n_rel, hidden_dim = 50, 10, 32
    p = 1  # TransH typically uses L1

    key = jax.random.PRNGKey(0)
    k_h, k_t, k_r = jax.random.split(key, 3)
    batch, n_sample = 2, 8                      # head/tail/rela shape [2, 8]
    head = jax.random.randint(k_h, (batch, n_sample), 0, n_ent, jnp.int32)
    tail = jax.random.randint(k_t, (batch, n_sample), 0, n_ent, jnp.int32)
    rela = jax.random.randint(k_r, (batch, n_sample), 0, n_rel, jnp.int32)

    # Primary path: fused in-kernel gather (tables VMEM-resident).
    model = TransHModuleJAX(n_ent, n_rel, hidden_dim, p=p, key=jax.random.PRNGKey(0))
    assert model.use_fused
    out_fused = model.forward(head, tail, rela)
    jax.block_until_ready(out_fused)

    ref = _reference_forward(model, head, tail, rela)
    assert out_fused.shape == head.shape, (out_fused.shape, head.shape)
    assert jnp.allclose(out_fused, ref, atol=1e-4, rtol=1e-4), (out_fused, ref)

    # Fallback path (used when the entity table is too large to keep resident):
    # exercise it too at the demo shapes to keep both kernels tested.
    model_fb = TransHModuleJAX(n_ent, n_rel, hidden_dim, p=p,
                               force_pregathered=True, key=jax.random.PRNGKey(0))
    assert not model_fb.use_fused
    out_fb = model_fb.forward(head, tail, rela)
    jax.block_until_ready(out_fb)
    assert jnp.allclose(out_fb, ref, atol=1e-4, rtol=1e-4), (out_fb, ref)

    print("KERNEL_OK")
</pallas_src>

<mosaic_0001>
module attributes {stable_mosaic.version = 11 : i64} {
  func.func @_transh_fused_kernel(%arg0: i32, %arg1: memref<1x128xi32, #tpu.memory_space<vmem>>, %arg2: memref<1x128xi32, #tpu.memory_space<vmem>>, %arg3: memref<1x128xi32, #tpu.memory_space<vmem>>, %arg4: memref<32x128xf32, #tpu.memory_space<vmem>>, %arg5: memref<64x128xf32, #tpu.memory_space<vmem>>, %arg6: memref<1x128xf32, #tpu.memory_space<vmem>>) attributes {dimension_semantics = [#tpu.dimension_semantics<parallel>], iteration_bounds = array<i64: 1>, scalar_prefetch = 0 : i64, scratch_operands = 0 : i64, tpu.core_type = #tpu.core_type<tc>, window_params = [{transform_indices = @transform_0, window_bounds = array<i64: 1, 128>}, {transform_indices = @transform_1, window_bounds = array<i64: 1, 128>}, {transform_indices = @transform_2, window_bounds = array<i64: 1, 128>}, {pipeline_mode = #tpu.pipeline_mode<synchronous>, transform_indices = @transform_3, window_bounds = array<i64: 32, 128>}, {pipeline_mode = #tpu.pipeline_mode<synchronous>, transform_indices = @transform_4, window_bounds = array<i64: 64, 128>}, {transform_indices = @transform_5, window_bounds = array<i64: 1, 128>}]} {
    %c0 = arith.constant 0 : index
    %c0_0 = arith.constant 0 : index
    %0 = vector.load %arg4[%c0, %c0_0] : memref<32x128xf32, #tpu.memory_space<vmem>>, vector<32x128xf32>
    %c0_1 = arith.constant 0 : index
    %c0_2 = arith.constant 0 : index
    %1 = vector.load %arg5[%c0_1, %c0_2] : memref<64x128xf32, #tpu.memory_space<vmem>>, vector<64x128xf32>
    %2 = tpu.iota {dimensions = array<i32: 0>} : vector<128x128xi32>
    %3 = tpu.iota {dimensions = array<i32: 0>} : vector<128x128xi32>
    %c0_3 = arith.constant 0 : index
    %c0_4 = arith.constant 0 : index
    %4 = vector.load %arg1[%c0_3, %c0_4] : memref<1x128xi32, #tpu.memory_space<vmem>>, vector<1x128xi32>
    %5 = vector.broadcast %4 : vector<1x128xi32> to vector<128x128xi32>
    %6 = arith.cmpi eq, %2, %5 : vector<128x128xi32>
    %7 = arith.extui %6 : vector<128x128xi1> to vector<128x128xi32>
    %8 = arith.sitofp %7 : vector<128x128xi32> to vector<128x128xf32>
    %c0_5 = arith.constant 0 : index
    %c0_6 = arith.constant 0 : index
    %9 = vector.load %arg2[%c0_5, %c0_6] : memref<1x128xi32, #tpu.memory_space<vmem>>, vector<1x128xi32>
    %10 = vector.broadcast %9 : vector<1x128xi32> to vector<128x128xi32>
    %11 = arith.cmpi eq, %2, %10 : vector<128x128xi32>
    %12 = arith.extui %11 : vector<128x128xi1> to vector<128x128xi32>
    %13 = arith.sitofp %12 : vector<128x128xi32> to vector<128x128xf32>
    %c0_7 = arith.constant 0 : index
    %c0_8 = arith.constant 0 : index
    %14 = vector.load %arg3[%c0_7, %c0_8] : memref<1x128xi32, #tpu.memory_space<vmem>>, vector<1x128xi32>
    %15 = vector.broadcast %14 : vector<1x128xi32> to vector<128x128xi32>
    %16 = arith.cmpi eq, %3, %15 : vector<128x128xi32>
    %17 = arith.extui %16 : vector<128x128xi1> to vector<128x128xi32>
    %18 = arith.sitofp %17 : vector<128x128xi32> to vector<128x128xf32>
    %cst = arith.constant dense<0.000000e+00> : vector<32x128xf32>
    %19 = tpu.matmul %0, %8, %cst {dimension_numbers = #tpu.dot_dimension_numbers<[1], [0], [0], [1], [0, 0, 1, 1], [], []>} : vector<32x128xf32>, vector<128x128xf32>, vector<32x128xf32> -> vector<32x128xf32>
    %cst_9 = arith.constant dense<0.000000e+00> : vector<32x128xf32>
    %20 = tpu.matmul %0, %13, %cst_9 {dimension_numbers = #tpu.dot_dimension_numbers<[1], [0], [0], [1], [0, 0, 1, 1], [], []>} : vector<32x128xf32>, vector<128x128xf32>, vector<32x128xf32> -> vector<32x128xf32>
    %cst_10 = arith.constant dense<0.000000e+00> : vector<64x128xf32>
    %21 = tpu.matmul %1, %18, %cst_10 {dimension_numbers = #tpu.dot_dimension_numbers<[1], [0], [0], [1], [0, 0, 1, 1], [], []>} : vector<64x128xf32>, vector<128x128xf32>, vector<64x128xf32> -> vector<64x128xf32>
    %22 = vector.extract_strided_slice %21 {offsets = [0, 0], sizes = [32, 128], strides = [1, 1]} : vector<64x128xf32> to vector<32x128xf32>
    %23 = vector.extract_strided_slice %21 {offsets = [32, 0], sizes = [32, 128], strides = [1, 1]} : vector<64x128xf32> to vector<32x128xf32>
    %24 = arith.mulf %19, %19 : vector<32x128xf32>
    %cst_11 = arith.constant dense<0.000000e+00> : vector<128xf32>
    %25 = vector.multi_reduction <add>, %24, %cst_11 [0] : vector<32x128xf32> to vector<128xf32>
    %26 = vector.shape_cast %25 : vector<128xf32> to vector<1x128xf32>
    %27 = arith.mulf %20, %20 : vector<32x128xf32>
    %cst_12 = arith.constant dense<0.000000e+00> : vector<128xf32>
    %28 = vector.multi_reduction <add>, %27, %cst_12 [0] : vector<32x128xf32> to vector<128xf32>
    %29 = vector.shape_cast %28 : vector<128xf32> to vector<1x128xf32>
    %30 = arith.mulf %22, %22 : vector<32x128xf32>
    %cst_13 = arith.constant dense<0.000000e+00> : vector<128xf32>
    %31 = vector.multi_reduction <add>, %30, %cst_13 [0] : vector<32x128xf32> to vector<128xf32>
    %32 = vector.shape_cast %31 : vector<128xf32> to vector<1x128xf32>
    %33 = arith.mulf %23, %23 : vector<32x128xf32>
    %cst_14 = arith.constant dense<0.000000e+00> : vector<128xf32>
    %34 = vector.multi_reduction <add>, %33, %cst_14 [0] : vector<32x128xf32> to vector<128xf32>
    %35 = vector.shape_cast %34 : vector<128xf32> to vector<1x128xf32>
    %36 = arith.mulf %23, %19 : vector<32x128xf32>
    %cst_15 = arith.constant dense<0.000000e+00> : vector<128xf32>
    %37 = vector.multi_reduction <add>, %36, %cst_15 [0] : vector<32x128xf32> to vector<128xf32>
    %38 = vector.shape_cast %37 : vector<128xf32> to vector<1x128xf32>
    %39 = arith.mulf %23, %20 : vector<32x128xf32>
    %cst_16 = arith.constant dense<0.000000e+00> : vector<128xf32>
    %40 = vector.multi_reduction <add>, %39, %cst_16 [0] : vector<32x128xf32> to vector<128xf32>
    %41 = vector.shape_cast %40 : vector<128xf32> to vector<1x128xf32>
    %cst_17 = arith.constant 1.000000e-24 : f32
    %42 = vector.broadcast %cst_17 : f32 to vector<1x128xf32>
    %43 = arith.maximumf %26, %42 : vector<1x128xf32>
    %44 = math.rsqrt %43 : vector<1x128xf32>
    %cst_18 = arith.constant 1.000000e-24 : f32
    %45 = vector.broadcast %cst_18 : f32 to vector<1x128xf32>
    %46 = arith.maximumf %29, %45 : vector<1x128xf32>
    %47 = math.rsqrt %46 : vector<1x128xf32>
    %cst_19 = arith.constant 1.000000e-24 : f32
    %48 = vector.broadcast %cst_19 : f32 to vector<1x128xf32>
    %49 = arith.maximumf %32, %48 : vector<1x128xf32>
    %50 = math.rsqrt %49 : vector<1x128xf32>
    %cst_20 = arith.constant 1.000000e-24 : f32
    %51 = vector.broadcast %cst_20 : f32 to vector<1x128xf32>
    %52 = arith.maximumf %35, %51 : vector<1x128xf32>
    %53 = math.rsqrt %52 : vector<1x128xf32>
    %cst_21 = arith.constant 0.000000e+00 : f32
    %54 = vector.broadcast %cst_21 : f32 to vector<1x128xf32>
    %55 = arith.subf %54, %44 : vector<1x128xf32>
    %cst_22 = arith.constant 0.000000e+00 : f32
    %56 = vector.broadcast %cst_22 : f32 to vector<1x128xf32>
    %57 = arith.subf %56, %50 : vector<1x128xf32>
    %58 = arith.mulf %41, %47 : vector<1x128xf32>
    %59 = arith.mulf %38, %44 : vector<1x128xf32>
    %60 = arith.subf %58, %59 : vector<1x128xf32>
    %cst_23 = arith.constant 0.000000e+00 : f32
    %61 = vector.broadcast %cst_23 : f32 to vector<1x128xf32>
    %62 = arith.subf %61, %60 : vector<1x128xf32>
    %63 = arith.mulf %53, %53 : vector<1x128xf32>
    %64 = arith.mulf %62, %63 : vector<1x128xf32>
    %65 = vector.broadcast %47 : vector<1x128xf32> to vector<32x128xf32>
    %66 = arith.mulf %20, %65 : vector<32x128xf32>
    %67 = vector.broadcast %55 : vector<1x128xf32> to vector<32x128xf32>
    %68 = arith.mulf %19, %67 : vector<32x128xf32>
    %69 = arith.addf %66, %68 : vector<32x128xf32>
    %70 = vector.broadcast %57 : vector<1x128xf32> to vector<32x128xf32>
    %71 = arith.mulf %22, %70 : vector<32x128xf32>
    %72 = arith.addf %69, %71 : vector<32x128xf32>
    %73 = vector.broadcast %64 : vector<1x128xf32> to vector<32x128xf32>
    %74 = arith.mulf %23, %73 : vector<32x128xf32>
    %75 = arith.addf %72, %74 : vector<32x128xf32>
    %76 = math.absf %75 : vector<32x128xf32>
    %cst_24 = arith.constant dense<0.000000e+00> : vector<128xf32>
    %77 = vector.multi_reduction <add>, %76, %cst_24 [0] : vector<32x128xf32> to vector<128xf32>
    %78 = vector.shape_cast %77 : vector<128xf32> to vector<1x128xf32>
    %c0_25 = arith.constant 0 : index
    %c0_26 = arith.constant 0 : index
    %79 = vector.load %arg6[%c0_25, %c0_26] : memref<1x128xf32, #tpu.memory_space<vmem>>, vector<1x128xf32>
    tpu.vector_store %arg6[%c0_25, %c0_26], %78 {strides = array<i32>} : memref<1x128xf32, #tpu.memory_space<vmem>>, vector<1x128xf32>,
    return
  }
  func.func @transform_0(%arg0: i32) -> (i32, i32) {
    %c0_i32 = arith.constant 0 : i32
    %c0_i32_0 = arith.constant 0 : i32
    return %c0_i32, %arg0 : i32, i32
  }
  func.func @transform_1(%arg0: i32) -> (i32, i32) {
    %c0_i32 = arith.constant 0 : i32
    %c0_i32_0 = arith.constant 0 : i32
    return %c0_i32, %arg0 : i32, i32
  }
  func.func @transform_2(%arg0: i32) -> (i32, i32) {
    %c0_i32 = arith.constant 0 : i32
    %c0_i32_0 = arith.constant 0 : i32
    return %c0_i32, %arg0 : i32, i32
  }
  func.func @transform_3(%arg0: i32) -> (i32, i32) {
    %c0_i32 = arith.constant 0 : i32
    %c0_i32_0 = arith.constant 0 : i32
    %c0_i32_1 = arith.constant 0 : i32
    return %c0_i32, %c0_i32_0 : i32, i32
  }
  func.func @transform_4(%arg0: i32) -> (i32, i32) {
    %c0_i32 = arith.constant 0 : i32
    %c0_i32_0 = arith.constant 0 : i32
    %c0_i32_1 = arith.constant 0 : i32
    return %c0_i32, %c0_i32_0 : i32, i32
  }
  func.func @transform_5(%arg0: i32) -> (i32, i32) {
    %c0_i32 = arith.constant 0 : i32
    %c0_i32_0 = arith.constant 0 : i32
    return %c0_i32, %arg0 : i32, i32
  }
}

</mosaic_0001>

<llo_original>
// kernel: tpu_custom_call.1
$region0: #{tpu_custom_call.1}
  #allocation0 [shape = 'u32[]', space=smem, size = 0x4, offset = 0x4, fixed_abs, tag = 'smem constant byte address 0x4 - core index']
  #allocation1 [shape = 'u32[144,128]{1,0:T(1,128)}', space=vmem, size = 0x12000, scoped, tag = 'internal scratch']
  %s0 = inlined_call_operand.hbm [shape: s32[1,128], index: 0, kind: input, shape index: {}]
  %s1 = inlined_call_operand.vmem [shape: s32[1,128], index: 1, kind: input, shape index: {}]
  %s2 = inlined_call_operand.vmem [shape: s32[1,128], index: 2, kind: input, shape index: {}]
  %s3 = inlined_call_operand.hbm [shape: f32[32,128], index: 3, kind: input, shape index: {}]
  %s4 = inlined_call_operand.hbm [shape: f32[64,128], index: 4, kind: input, shape index: {}]
  %s5 = inlined_call_operand.hbm [shape: f32[1,128], index: 5, kind: output, shape index: {}]
  %s6 = sld [smem:[#allocation0]]
  $region42: #{tpu_custom_call.1} parent=0
    _
  %s8 = ssub.s32 1, %s6
  %s9 = scalar_select 0, %s8, %s6
  $region1: #{tpu_custom_call.1} parent=0
    #allocation2 [shape = 'u8[512]{0}', space=vmem, size = 0x400, scoped, tag = 'input window, operand 0, single buffered']
    #allocation3 [shape = 's32[1]{0}', space=sflag, size = 0x4, scoped, tag = 'scoped memory for tpu_custom_call.1']
    #allocation4 [shape = 's32[1]{0}', space=sflag, size = 0x4, scoped, tag = 'scoped memory for tpu_custom_call.1']
    #allocation5 [shape = 'u8[16384]{0}', space=vmem, size = 0x4000, scoped, tag = 'input window, operand 3, single buffered']
    #allocation6 [shape = 's32[1]{0}', space=sflag, size = 0x4, scoped, tag = 'scoped memory for tpu_custom_call.1']
    #allocation7 [shape = 'u8[32768]{0}', space=vmem, size = 0x8000, scoped, tag = 'input window, operand 4, single buffered']
    #allocation8 [shape = 'u8[512]{0}', space=vmem, size = 0x400, scoped, tag = 'output window, operand 0, single buffered']
    %10 = vsyncpa [#allocation3], 0
    %11 = vsyncpa [#allocation6], 0
    %12 = vsyncpa [#allocation4], 0
    // Predicated region
    $region2: #{tpu_custom_call.1} parent=1 // pred_check
      _
    $region3: #{tpu_custom_call.1} parent=1 // pred_check_branch
      %14 = sbr.rel (0) target = $region5
    $region4: #{tpu_custom_call.1} parent=1 // pred_region
      %s16 = ssub.s32 16, 16
      %17 = vsyncadd [#allocation3], %s16
      %s19 = sshll.u32 [#allocation2], 4
      %s20 = int_to_ptr.vmem [resolvable:$true] %s19
      %22 = dma.hbm_to_vmem [thread:$0]  %s0, 16, %s20, [#allocation3]
    $region5: #{tpu_custom_call.1} parent=1 // pred_fallthru
      _
    // Predicated region
    $region6: #{tpu_custom_call.1} parent=1 // pred_check
      _
    $region7: #{tpu_custom_call.1} parent=1 // pred_check_branch
      %24 = sbr.rel (0) target = $region9
    $region8: #{tpu_custom_call.1} parent=1 // pred_region
      _
    $region9: #{tpu_custom_call.1} parent=1 // pred_fallthru
      _
    // Predicated region
    $region10: #{tpu_custom_call.1} parent=1 // pred_check
      _
    $region11: #{tpu_custom_call.1} parent=1 // pred_check_branch
      %26 = sbr.rel (0) target = $region13
    $region12: #{tpu_custom_call.1} parent=1 // pred_region
      _
    $region13: #{tpu_custom_call.1} parent=1 // pred_fallthru
      _
    // Predicated region
    $region14: #{tpu_custom_call.1} parent=1 // pred_check
      _
    $region15: #{tpu_custom_call.1} parent=1 // pred_check_branch
      %28 = sbr.rel (0) target = $region17
    $region16: #{tpu_custom_call.1} parent=1 // pred_region
      %s30 = ssub.s32 512, 512
      %31 = vsyncadd [#allocation6], %s30
      %s32 = sshll.u32 [#allocation5], 4
      %s33 = int_to_ptr.vmem [resolvable:$true] %s32
      %38 = dma.hbm_to_vmem [thread:$0]  %s3, 512, %s33, [#allocation6], 128, 128, 8
    $region17: #{tpu_custom_call.1} parent=1 // pred_fallthru
      _
    // Predicated region
    $region18: #{tpu_custom_call.1} parent=1 // pred_check
      _
    $region19: #{tpu_custom_call.1} parent=1 // pred_check_branch
      %40 = sbr.rel (0) target = $region21
    $region20: #{tpu_custom_call.1} parent=1 // pred_region
      %s42 = ssub.s32 1024, 1024
      %43 = vsyncadd [#allocation6], %s42
      %s44 = sshll.u32 [#allocation7], 4
      %s45 = int_to_ptr.vmem [resolvable:$true] %s44
      %50 = dma.hbm_to_vmem [thread:$0]  %s4, 1024, %s45, [#allocation6], 128, 128, 8
    $region21: #{tpu_custom_call.1} parent=1 // pred_fallthru
      _
    // Predicated region
    $region22: #{tpu_custom_call.1} parent=1 // pred_check
      _
    $region23: #{tpu_custom_call.1} parent=1 // pred_check_branch
      %52 = sbr.rel (0) target = $region25
    $region24: #{tpu_custom_call.1} parent=1 // pred_region
      %53 = dma.done [#allocation3], 16
    $region25: #{tpu_custom_call.1} parent=1 // pred_fallthru
      _
    // Predicated region
    $region26: #{tpu_custom_call.1} parent=1 // pred_check
      _
    $region27: #{tpu_custom_call.1} parent=1 // pred_check_branch
      %55 = sbr.rel (0) target = $region29
    $region28: #{tpu_custom_call.1} parent=1 // pred_region
      %56 = dma.done [#allocation6], 512
    $region29: #{tpu_custom_call.1} parent=1 // pred_fallthru
      _
    // Predicated region
    $region30: #{tpu_custom_call.1} parent=1 // pred_check
      _
    $region31: #{tpu_custom_call.1} parent=1 // pred_check_branch
      %58 = sbr.rel (0) target = $region33
    $region32: #{tpu_custom_call.1} parent=1 // pred_region
      %59 = dma.done [#allocation6], 1024
    $region33: #{tpu_custom_call.1} parent=1 // pred_fallthru
      _
    %v60 = vld [vmem:[#allocation5] sm:$0xff]
    %v61 = vld [vmem:[#allocation5 + $0x8] sm:$0xff]
    %v62 = vld [vmem:[#allocation5 + $0x10] sm:$0xff]
    %v63 = vld [vmem:[#allocation5 + $0x18] sm:$0xff]
    %v64 = vld [vmem:[#allocation7] sm:$0xff]
    %v65 = vld [vmem:[#allocation7 + $0x8] sm:$0xff]
    %v66 = vld [vmem:[#allocation7 + $0x10] sm:$0xff]
    %v67 = vld [vmem:[#allocation7 + $0x18] sm:$0xff]
    %v68 = vld [vmem:[#allocation7 + $0x20] sm:$0xff]
    %v69 = vld [vmem:[#allocation7 + $0x28] sm:$0xff]
    %v70 = vld [vmem:[#allocation7 + $0x30] sm:$0xff]
    %v71 = vld [vmem:[#allocation7 + $0x38] sm:$0xff]
    %v72 = vlaneseq
    %v73 = vshrl.u32 %v72, 7
    %v74 = vadd.s32 %v73, 8
    %v75 = vadd.s32 %v73, 16
    %v76 = vadd.s32 %v73, 24
    %v77 = vadd.s32 %v73, 32
    %v78 = vadd.s32 %v73, 40
    %v79 = vadd.s32 %v73, 48
    %v80 = vadd.s32 %v73, 56
    %v81 = vadd.s32 %v73, 64
    %v82 = vadd.s32 %v73, 72
    %v83 = vadd.s32 %v73, 80
    %v84 = vadd.s32 %v73, 88
    %v85 = vadd.s32 %v73, 96
    %v86 = vadd.s32 %v73, 104
    %v87 = vadd.s32 %v73, 112
    %v88 = vadd.s32 %v73, 120
    %v89 = vld [vmem:[#allocation2] sm:$0x1]
    %v90 = vlaneseq
    %v91 = vshrl.u32 %v90, 7
    %v92 = vsub.s32 0, %v91
    %v93 = vrot.slane %v89, %v92
    %vm94 = vcmp.eq.s32.totalorder %v73, %v93
    %vm95 = vcmp.eq.s32.totalorder %v74, %v93
    %vm96 = vcmp.eq.s32.totalorder %v75, %v93
    %vm97 = vcmp.eq.s32.totalorder %v76, %v93
    %vm98 = vcmp.eq.s32.totalorder %v77, %v93
    %vm99 = vcmp.eq.s32.totalorder %v78, %v93
    %vm100 = vcmp.eq.s32.totalorder %v79, %v93
    %vm101 = vcmp.eq.s32.totalorder %v80, %v93
    %vm102 = vcmp.eq.s32.totalorder %v81, %v93
    %vm103 = vcmp.eq.s32.totalorder %v82, %v93
    %vm104 = vcmp.eq.s32.totalorder %v83, %v93
    %vm105 = vcmp.eq.s32.totalorder %v84, %v93
    %vm106 = vcmp.eq.s32.totalorder %v85, %v93
    %vm107 = vcmp.eq.s32.totalorder %v86, %v93
    %vm108 = vcmp.eq.s32.totalorder %v87, %v93
    %vm109 = vcmp.eq.s32.totalorder %v88, %v93
    %v110 = vsel %vm94, 1, 0
    %v111 = vsel %vm95, 1, 0
    %v112 = vsel %vm96, 1, 0
    %v113 = vsel %vm97, 1, 0
    %v114 = vsel %vm98, 1, 0
    %v115 = vsel %vm99, 1, 0
    %v116 = vsel %vm100, 1, 0
    %v117 = vsel %vm101, 1, 0
    %v118 = vsel %vm102, 1, 0
    %v119 = vsel %vm103, 1, 0
    %v120 = vsel %vm104, 1, 0
    %v121 = vsel %vm105, 1, 0
    %v122 = vsel %vm106, 1, 0
    %v123 = vsel %vm107, 1, 0
    %v124 = vsel %vm108, 1, 0
    %v125 = vsel %vm109, 1, 0
    %v126 = vcvt.s32.f32 %v110
    %v127 = vcvt.s32.f32 %v111
    %v128 = vcvt.s32.f32 %v112
    %v129 = vcvt.s32.f32 %v113
    %v130 = vcvt.s32.f32 %v114
    %v131 = vcvt.s32.f32 %v115
    %v132 = vcvt.s32.f32 %v116
    %v133 = vcvt.s32.f32 %v117
    %v134 = vcvt.s32.f32 %v118
    %v135 = vcvt.s32.f32 %v119
    %v136 = vcvt.s32.f32 %v120
    %v137 = vcvt.s32.f32 %v121
    %v138 = vcvt.s32.f32 %v122
    %v139 = vcvt.s32.f32 %v123
    %v140 = vcvt.s32.f32 %v124
    %v141 = vcvt.s32.f32 %v125
    %v142 = vld [vmem:[%s1] sm:$0x1]
    %v143 = vlaneseq
    %v144 = vshrl.u32 %v143, 7
    %v145 = vsub.s32 0, %v144
    %v146 = vrot.slane %v142, %v145
    %vm147 = vcmp.eq.s32.totalorder %v73, %v146
    %vm148 = vcmp.eq.s32.totalorder %v74, %v146
    %vm149 = vcmp.eq.s32.totalorder %v75, %v146
    %vm150 = vcmp.eq.s32.totalorder %v76, %v146
    %vm151 = vcmp.eq.s32.totalorder %v77, %v146
    %vm152 = vcmp.eq.s32.totalorder %v78, %v146
    %vm153 = vcmp.eq.s32.totalorder %v79, %v146
    %vm154 = vcmp.eq.s32.totalorder %v80, %v146
    %vm155 = vcmp.eq.s32.totalorder %v81, %v146
    %vm156 = vcmp.eq.s32.totalorder %v82, %v146
    %vm157 = vcmp.eq.s32.totalorder %v83, %v146
    %vm158 = vcmp.eq.s32.totalorder %v84, %v146
    %vm159 = vcmp.eq.s32.totalorder %v85, %v146
    %vm160 = vcmp.eq.s32.totalorder %v86, %v146
    %vm161 = vcmp.eq.s32.totalorder %v87, %v146
    %vm162 = vcmp.eq.s32.totalorder %v88, %v146
    %v163 = vsel %vm147, 1, 0
    %v164 = vsel %vm148, 1, 0
    %v165 = vsel %vm149, 1, 0
    %v166 = vsel %vm150, 1, 0
    %v167 = vsel %vm151, 1, 0
    %v168 = vsel %vm152, 1, 0
    %v169 = vsel %vm153, 1, 0
    %v170 = vsel %vm154, 1, 0
    %v171 = vsel %vm155, 1, 0
    %v172 = vsel %vm156, 1, 0
    %v173 = vsel %vm157, 1, 0
    %v174 = vsel %vm158, 1, 0
    %v175 = vsel %vm159, 1, 0
    %v176 = vsel %vm160, 1, 0
    %v177 = vsel %vm161, 1, 0
    %v178 = vsel %vm162, 1, 0
    %v179 = vcvt.s32.f32 %v163
    %v180 = vcvt.s32.f32 %v164
    %v181 = vcvt.s32.f32 %v165
    %v182 = vcvt.s32.f32 %v166
    %v183 = vcvt.s32.f32 %v167
    %v184 = vcvt.s32.f32 %v168
    %v185 = vcvt.s32.f32 %v169
    %v186 = vcvt.s32.f32 %v170
    %v187 = vcvt.s32.f32 %v171
    %v188 = vcvt.s32.f32 %v172
    %v189 = vcvt.s32.f32 %v173
    %v190 = vcvt.s32.f32 %v174
    %v191 = vcvt.s32.f32 %v175
    %v192 = vcvt.s32.f32 %v176
    %v193 = vcvt.s32.f32 %v177
    %v194 = vcvt.s32.f32 %v178
    %v195 = vld [vmem:[%s2] sm:$0x1]
    %v196 = vlaneseq
    %v197 = vshrl.u32 %v196, 7
    %v198 = vsub.s32 0, %v197
    %v199 = vrot.slane %v195, %v198
    %vm200 = vcmp.eq.s32.totalorder %v73, %v199
    %vm201 = vcmp.eq.s32.totalorder %v74, %v199
    %vm202 = vcmp.eq.s32.totalorder %v75, %v199
    %vm203 = vcmp.eq.s32.totalorder %v76, %v199
    %vm204 = vcmp.eq.s32.totalorder %v77, %v199
    %vm205 = vcmp.eq.s32.totalorder %v78, %v199
    %vm206 = vcmp.eq.s32.totalorder %v79, %v199
    %vm207 = vcmp.eq.s32.totalorder %v80, %v199
    %vm208 = vcmp.eq.s32.totalorder %v81, %v199
    %vm209 = vcmp.eq.s32.totalorder %v82, %v199
    %vm210 = vcmp.eq.s32.totalorder %v83, %v199
    %vm211 = vcmp.eq.s32.totalorder %v84, %v199
    %vm212 = vcmp.eq.s32.totalorder %v85, %v199
    %vm213 = vcmp.eq.s32.totalorder %v86, %v199
    %vm214 = vcmp.eq.s32.totalorder %v87, %v199
    %vm215 = vcmp.eq.s32.totalorder %v88, %v199
    %v216 = vsel %vm200, 1, 0
    %v217 = vsel %vm201, 1, 0
    %v218 = vsel %vm202, 1, 0
    %v219 = vsel %vm203, 1, 0
    %v220 = vsel %vm204, 1, 0
    %v221 = vsel %vm205, 1, 0
    %v222 = vsel %vm206, 1, 0
    %v223 = vsel %vm207, 1, 0
    %v224 = vsel %vm208, 1, 0
    %v225 = vsel %vm209, 1, 0
    %v226 = vsel %vm210, 1, 0
    %v227 = vsel %vm211, 1, 0
    %v228 = vsel %vm212, 1, 0
    %v229 = vsel %vm213, 1, 0
    %v230 = vsel %vm214, 1, 0
    %v231 = vsel %vm215, 1, 0
    %v232 = vcvt.s32.f32 %v216
    %v233 = vcvt.s32.f32 %v217
    %v234 = vcvt.s32.f32 %v218
    %v235 = vcvt.s32.f32 %v219
    %v236 = vcvt.s32.f32 %v220
    %v237 = vcvt.s32.f32 %v221
    %v238 = vcvt.s32.f32 %v222
    %v239 = vcvt.s32.f32 %v223
    %v240 = vcvt.s32.f32 %v224
    %v241 = vcvt.s32.f32 %v225
    %v242 = vcvt.s32.f32 %v226
    %v243 = vcvt.s32.f32 %v227
    %v244 = vcvt.s32.f32 %v228
    %v245 = vcvt.s32.f32 %v229
    %v246 = vcvt.s32.f32 %v230
    %v247 = vcvt.s32.f32 %v231
    %248 = vmatprep.subr.mxu0 0.0
    %249 = vmatpush1.msra.mxu0 %v126
    %250 = vmatprep.subr.mxu0 0.0
    %251 = vmatpush1.msra.mxu0 %v127
    %252 = vmatprep.subr.mxu0 0.0
    %253 = vmatpush1.msra.mxu0 %v128
    %254 = vmatprep.subr.mxu0 0.0
    %255 = vmatpush1.msra.mxu0 %v129
    %256 = vmatprep.subr.mxu0 0.0
    %257 = vmatpush1.msra.mxu0 %v130
    %258 = vmatprep.subr.mxu0 0.0
    %259 = vmatpush1.msra.mxu0 %v131
    %260 = vmatprep.subr.mxu0 0.0
    %261 = vmatpush1.msra.mxu0 %v132
    %262 = vmatprep.subr.mxu0 0.0
    %263 = vmatpush1.msra.mxu0 %v133
    %264 = vmatprep.subr.mxu0 0.0
    %265 = vmatpush1.msra.mxu0 %v134
    %266 = vmatprep.subr.mxu0 0.0
    %267 = vmatpush1.msra.mxu0 %v135
    %268 = vmatprep.subr.mxu0 0.0
    %269 = vmatpush1.msra.mxu0 %v136
    %270 = vmatprep.subr.mxu0 0.0
    %271 = vmatpush1.msra.mxu0 %v137
    %272 = vmatprep.subr.mxu0 0.0
    %273 = vmatpush1.msra.mxu0 %v138
    %274 = vmatprep.subr.mxu0 0.0
    %275 = vmatpush1.msra.mxu0 %v139
    %276 = vmatprep.subr.mxu0 0.0
    %277 = vmatpush1.msra.mxu0 %v140
    %278 = vmatprep.subr.mxu0 0.0
    %279 = vmatpush1.msra.mxu0 %v141
    %280 = vmatprep.subr.mxu0 0.0
    %281 = vmatpush1.msra.mxu0 0.0
    %282 = vmatprep.subr.mxu0 0.0
    %283 = vmatpush1.msra.mxu0 0.0
    %284 = vmatprep.subr.mxu0 0.0
    %285 = vmatpush1.msra.mxu0 0.0
    %286 = vmatprep.subr.mxu0 0.0
    %287 = vmatpush1.msra.mxu0 0.0
    %288 = vmatprep.subr.mxu0 0.0
    %289 = vmatpush1.msra.mxu0 0.0
    %290 = vmatprep.subr.mxu0 0.0
    %291 = vmatpush1.msra.mxu0 0.0
    %292 = vmatprep.subr.mxu0 0.0
    %293 = vmatpush1.msra.mxu0 0.0
    %294 = vmatprep.subr.mxu0 0.0
    %295 = vmatpush1.msra.mxu0 0.0
    %296 = vmatprep.subr.mxu0 0.0
    %297 = vmatpush1.msra.mxu0 0.0
    %298 = vmatprep.subr.mxu0 0.0
    %299 = vmatpush1.msra.mxu0 0.0
    %300 = vmatprep.subr.mxu0 0.0
    %301 = vmatpush1.msra.mxu0 0.0
    %302 = vmatprep.subr.mxu0 0.0
    %303 = vmatpush1.msra.mxu0 0.0
    %304 = vmatprep.subr.mxu0 0.0
    %305 = vmatpush1.msra.mxu0 0.0
    %306 = vmatprep.subr.mxu0 0.0
    %307 = vmatpush1.msra.mxu0 0.0
    %308 = vmatprep.subr.mxu0 0.0
    %309 = vmatpush1.msra.mxu0 0.0
    %310 = vmatprep.subr.mxu0 0.0
    %311 = vmatpush1.msra.mxu0 0.0
    %312 = vmatprep.mubr.f32.mxu0 0.0
    %313 = vmatmul.mubr.f32.gmra.mrb[0].mxu0 %v60
    %v314 = vpop.f32.mrb[0].mxu0
    %v315 = vadd.f32 0.0, %v314
    %v316 = vpop.f32.mrb[0].mxu0
    %317 = vmatprep.mubr.f32.mxu0 0.0
    %318 = vmatmul.mubr.f32.gmra.mrb[0].mxu0 %v61
    %v319 = vpop.f32.mrb[0].mxu0
    %v320 = vadd.f32 0.0, %v319
    %v321 = vpop.f32.mrb[0].mxu0
    %322 = vmatprep.mubr.f32.mxu0 0.0
    %323 = vmatmul.mubr.f32.gmra.mrb[0].mxu0 %v62
    %v324 = vpop.f32.mrb[0].mxu0
    %v325 = vadd.f32 0.0, %v324
    %v326 = vpop.f32.mrb[0].mxu0
    %327 = vmatprep.mubr.f32.mxu0 0.0
    %328 = vmatmul.mubr.f32.gmra.mrb[0].mxu0 %v63
    %v329 = vpop.f32.mrb[0].mxu0
    %v330 = vadd.f32 0.0, %v329
    %v331 = vpop.f32.mrb[0].mxu0
    %332 = vdwg.mxu0
    %333 = vmatprep.subr.mxu0 0.0
    %334 = vmatpush1.msra.mxu0 %v179
    %335 = vmatprep.subr.mxu0 0.0
    %336 = vmatpush1.msra.mxu0 %v180
    %337 = vmatprep.subr.mxu0 0.0
    %338 = vmatpush1.msra.mxu0 %v181
    %339 = vmatprep.subr.mxu0 0.0
    %340 = vmatpush1.msra.mxu0 %v182
    %341 = vmatprep.subr.mxu0 0.0
    %342 = vmatpush1.msra.mxu0 %v183
    %343 = vmatprep.subr.mxu0 0.0
    %344 = vmatpush1.msra.mxu0 %v184
    %345 = vmatprep.subr.mxu0 0.0
    %346 = vmatpush1.msra.mxu0 %v185
    %347 = vmatprep.subr.mxu0 0.0
    %348 = vmatpush1.msra.mxu0 %v186
    %349 = vmatprep.subr.mxu0 0.0
    %350 = vmatpush1.msra.mxu0 %v187
    %351 = vmatprep.subr.mxu0 0.0
    %352 = vmatpush1.msra.mxu0 %v188
    %353 = vmatprep.subr.mxu0 0.0
    %354 = vmatpush1.msra.mxu0 %v189
    %355 = vmatprep.subr.mxu0 0.0
    %356 = vmatpush1.msra.mxu0 %v190
    %357 = vmatprep.subr.mxu0 0.0
    %358 = vmatpush1.msra.mxu0 %v191
    %359 = vmatprep.subr.mxu0 0.0
    %360 = vmatpush1.msra.mxu0 %v192
    %361 = vmatprep.subr.mxu0 0.0
    %362 = vmatpush1.msra.mxu0 %v193
    %363 = vmatprep.subr.mxu0 0.0
    %364 = vmatpush1.msra.mxu0 %v194
    %365 = vmatprep.subr.mxu0 0.0
    %366 = vmatpush1.msra.mxu0 0.0
    %367 = vmatprep.subr.mxu0 0.0
    %368 = vmatpush1.msra.mxu0 0.0
    %369 = vmatprep.subr.mxu0 0.0
    %370 = vmatpush1.msra.mxu0 0.0
    %371 = vmatprep.subr.mxu0 0.0
    %372 = vmatpush1.msra.mxu0 0.0
    %373 = vmatprep.subr.mxu0 0.0
    %374 = vmatpush1.msra.mxu0 0.0
    %375 = vmatprep.subr.mxu0 0.0
    %376 = vmatpush1.msra.mxu0 0.0
    %377 = vmatprep.subr.mxu0 0.0
    %378 = vmatpush1.msra.mxu0 0.0
    %379 = vmatprep.subr.mxu0 0.0
    %380 = vmatpush1.msra.mxu0 0.0
    %381 = vmatprep.subr.mxu0 0.0
    %382 = vmatpush1.msra.mxu0 0.0
    %383 = vmatprep.subr.mxu0 0.0
    %384 = vmatpush1.msra.mxu0 0.0
    %385 = vmatprep.subr.mxu0 0.0
    %386 = vmatpush1.msra.mxu0 0.0
    %387 = vmatprep.subr.mxu0 0.0
    %388 = vmatpush1.msra.mxu0 0.0
    %389 = vmatprep.subr.mxu0 0.0
    %390 = vmatpush1.msra.mxu0 0.0
    %391 = vmatprep.subr.mxu0 0.0
    %392 = vmatpush1.msra.mxu0 0.0
    %393 = vmatprep.subr.mxu0 0.0
    %394 = vmatpush1.msra.mxu0 0.0
    %395 = vmatprep.subr.mxu0 0.0
    %396 = vmatpush1.msra.mxu0 0.0
    %397 = vmatprep.mubr.f32.mxu0 0.0
    %398 = vmatmul.mubr.f32.gmra.mrb[0].mxu0 %v60
    %v399 = vpop.f32.mrb[0].mxu0
    %v400 = vadd.f32 0.0, %v399
    %v401 = vpop.f32.mrb[0].mxu0
    %402 = vmatprep.mubr.f32.mxu0 0.0
    %403 = vmatmul.mubr.f32.gmra.mrb[0].mxu0 %v61
    %v404 = vpop.f32.mrb[0].mxu0
    %v405 = vadd.f32 0.0, %v404
    %v406 = vpop.f32.mrb[0].mxu0
    %407 = vmatprep.mubr.f32.mxu0 0.0
    %408 = vmatmul.mubr.f32.gmra.mrb[0].mxu0 %v62
    %v409 = vpop.f32.mrb[0].mxu0
    %v410 = vadd.f32 0.0, %v409
    %v411 = vpop.f32.mrb[0].mxu0
    %412 = vmatprep.mubr.f32.mxu0 0.0
    %413 = vmatmul.mubr.f32.gmra.mrb[0].mxu0 %v63
    %v414 = vpop.f32.mrb[0].mxu0
    %v415 = vadd.f32 0.0, %v414
    %v416 = vpop.f32.mrb[0].mxu0
    %417 = vdwg.mxu0
    %418 = vmatprep.subr.mxu0 0.0
    %419 = vmatpush1.msra.mxu0 %v232
    %420 = vmatprep.subr.mxu0 0.0
    %421 = vmatpush1.msra.mxu0 %v233
    %422 = vmatprep.subr.mxu0 0.0
    %423 = vmatpush1.msra.mxu0 %v234
    %424 = vmatprep.subr.mxu0 0.0
    %425 = vmatpush1.msra.mxu0 %v235
    %426 = vmatprep.subr.mxu0 0.0
    %427 = vmatpush1.msra.mxu0 %v236
    %428 = vmatprep.subr.mxu0 0.0
    %429 = vmatpush1.msra.mxu0 %v237
    %430 = vmatprep.subr.mxu0 0.0
    %431 = vmatpush1.msra.mxu0 %v238
    %432 = vmatprep.subr.mxu0 0.0
    %433 = vmatpush1.msra.mxu0 %v239
    %434 = vmatprep.subr.mxu0 0.0
    %435 = vmatpush1.msra.mxu0 %v240
    %436 = vmatprep.subr.mxu0 0.0
    %437 = vmatpush1.msra.mxu0 %v241
    %438 = vmatprep.subr.mxu0 0.0
    %439 = vmatpush1.msra.mxu0 %v242
    %440 = vmatprep.subr.mxu0 0.0
    %441 = vmatpush1.msra.mxu0 %v243
    %442 = vmatprep.subr.mxu0 0.0
    %443 = vmatpush1.msra.mxu0 %v244
    %444 = vmatprep.subr.mxu0 0.0
    %445 = vmatpush1.msra.mxu0 %v245
    %446 = vmatprep.subr.mxu0 0.0
    %447 = vmatpush1.msra.mxu0 %v246
    %448 = vmatprep.subr.mxu0 0.0
    %449 = vmatpush1.msra.mxu0 %v247
    %450 = vmatprep.subr.mxu0 0.0
    %451 = vmatpush1.msra.mxu0 0.0
    %452 = vmatprep.subr.mxu0 0.0
    %453 = vmatpush1.msra.mxu0 0.0
    %454 = vmatprep.subr.mxu0 0.0
    %455 = vmatpush1.msra.mxu0 0.0
    %456 = vmatprep.subr.mxu0 0.0
    %457 = vmatpush1.msra.mxu0 0.0
    %458 = vmatprep.subr.mxu0 0.0
    %459 = vmatpush1.msra.mxu0 0.0
    %460 = vmatprep.subr.mxu0 0.0
    %461 = vmatpush1.msra.mxu0 0.0
    %462 = vmatprep.subr.mxu0 0.0
    %463 = vmatpush1.msra.mxu0 0.0
    %464 = vmatprep.subr.mxu0 0.0
    %465 = vmatpush1.msra.mxu0 0.0
    %466 = vmatprep.subr.mxu0 0.0
    %467 = vmatpush1.msra.mxu0 0.0
    %468 = vmatprep.subr.mxu0 0.0
    %469 = vmatpush1.msra.mxu0 0.0
    %470 = vmatprep.subr.mxu0 0.0
    %471 = vmatpush1.msra.mxu0 0.0
    %472 = vmatprep.subr.mxu0 0.0
    %473 = vmatpush1.msra.mxu0 0.0
    %474 = vmatprep.subr.mxu0 0.0
    %475 = vmatpush1.msra.mxu0 0.0
    %476 = vmatprep.subr.mxu0 0.0
    %477 = vmatpush1.msra.mxu0 0.0
    %478 = vmatprep.subr.mxu0 0.0
    %479 = vmatpush1.msra.mxu0 0.0
    %480 = vmatprep.subr.mxu0 0.0
    %481 = vmatpush1.msra.mxu0 0.0
    %482 = vmatprep.mubr.f32.mxu0 0.0
    %483 = vmatmul.mubr.f32.gmra.mrb[0].mxu0 %v64
    %v484 = vpop.f32.mrb[0].mxu0
    %v485 = vadd.f32 0.0, %v484
    %v486 = vpop.f32.mrb[0].mxu0
    %487 = vmatprep.mubr.f32.mxu0 0.0
    %488 = vmatmul.mubr.f32.gmra.mrb[0].mxu0 %v65
    %v489 = vpop.f32.mrb[0].mxu0
    %v490 = vadd.f32 0.0, %v489
    %v491 = vpop.f32.mrb[0].mxu0
    %492 = vmatprep.mubr.f32.mxu0 0.0
    %493 = vmatmul.mubr.f32.gmra.mrb[0].mxu0 %v66
    %v494 = vpop.f32.mrb[0].mxu0
    %v495 = vadd.f32 0.0, %v494
    %v496 = vpop.f32.mrb[0].mxu0
    %497 = vmatprep.mubr.f32.mxu0 0.0
    %498 = vmatmul.mubr.f32.gmra.mrb[0].mxu0 %v67
    %v499 = vpop.f32.mrb[0].mxu0
    %v500 = vadd.f32 0.0, %v499
    %v501 = vpop.f32.mrb[0].mxu0
    %502 = vmatprep.mubr.f32.mxu0 0.0
    %503 = vmatmul.mubr.f32.gmra.mrb[0].mxu0 %v68
    %v504 = vpop.f32.mrb[0].mxu0
    %v505 = vadd.f32 0.0, %v504
    %v506 = vpop.f32.mrb[0].mxu0
    %507 = vmatprep.mubr.f32.mxu0 0.0
    %508 = vmatmul.mubr.f32.gmra.mrb[0].mxu0 %v69
    %v509 = vpop.f32.mrb[0].mxu0
    %v510 = vadd.f32 0.0, %v509
    %v511 = vpop.f32.mrb[0].mxu0
    %512 = vmatprep.mubr.f32.mxu0 0.0
    %513 = vmatmul.mubr.f32.gmra.mrb[0].mxu0 %v70
    %v514 = vpop.f32.mrb[0].mxu0
    %v515 = vadd.f32 0.0, %v514
    %v516 = vpop.f32.mrb[0].mxu0
    %517 = vmatprep.mubr.f32.mxu0 0.0
    %518 = vmatmul.mubr.f32.gmra.mrb[0].mxu0 %v71
    %v519 = vpop.f32.mrb[0].mxu0
    %v520 = vadd.f32 0.0, %v519
    %v521 = vpop.f32.mrb[0].mxu0
    %522 = vdwg.mxu0
    %v523 = vmul.f32 %v315, %v315
    %v524 = vmul.f32 %v320, %v320
    %v525 = vmul.f32 %v325, %v325
    %v526 = vmul.f32 %v330, %v330
    %v527 = vadd.f32 %v523, %v524
    %v528 = vadd.f32 %v527, %v525
    %v529 = vadd.f32 %v528, %v526
    %v530 = vrot.slane %v529, 4
    %v531 = vadd.f32 %v529, %v530
    %v532 = vrot.slane %v531, 2
    %v533 = vadd.f32 %v531, %v532
    %v534 = vrot.slane %v533, 1
    %v535 = vadd.f32 %v533, %v534
    %v536 = vmul.f32 %v400, %v400
    %v537 = vmul.f32 %v405, %v405
    %v538 = vmul.f32 %v410, %v410
    %v539 = vmul.f32 %v415, %v415
    %v540 = vadd.f32 %v536, %v537
    %v541 = vadd.f32 %v540, %v538
    %v542 = vadd.f32 %v541, %v539
    %v543 = vrot.slane %v542, 4
    %v544 = vadd.f32 %v542, %v543
    %v545 = vrot.slane %v544, 2
    %v546 = vadd.f32 %v544, %v545
    %v547 = vrot.slane %v546, 1
    %v548 = vadd.f32 %v546, %v547
    %v549 = vmul.f32 %v485, %v485
    %v550 = vmul.f32 %v490, %v490
    %v551 = vmul.f32 %v495, %v495
    %v552 = vmul.f32 %v500, %v500
    %v553 = vadd.f32 %v549, %v550
    %v554 = vadd.f32 %v553, %v551
    %v555 = vadd.f32 %v554, %v552
    %v556 = vrot.slane %v555, 4
    %v557 = vadd.f32 %v555, %v556
    %v558 = vrot.slane %v557, 2
    %v559 = vadd.f32 %v557, %v558
    %v560 = vrot.slane %v559, 1
    %v561 = vadd.f32 %v559, %v560
    %v562 = vmul.f32 %v505, %v505
    %v563 = vmul.f32 %v510, %v510
    %v564 = vmul.f32 %v515, %v515
    %v565 = vmul.f32 %v520, %v520
    %v566 = vadd.f32 %v562, %v563
    %v567 = vadd.f32 %v566, %v564
    %v568 = vadd.f32 %v567, %v565
    %v569 = vrot.slane %v568, 4
    %v570 = vadd.f32 %v568, %v569
    %v571 = vrot.slane %v570, 2
    %v572 = vadd.f32 %v570, %v571
    %v573 = vrot.slane %v572, 1
    %v574 = vadd.f32 %v572, %v573
    %v575 = vmul.f32 %v505, %v315
    %v576 = vmul.f32 %v510, %v320
    %v577 = vmul.f32 %v515, %v325
    %v578 = vmul.f32 %v520, %v330
    %v579 = vadd.f32 %v575, %v576
    %v580 = vadd.f32 %v579, %v577
    %v581 = vadd.f32 %v580, %v578
    %v582 = vrot.slane %v581, 4
    %v583 = vadd.f32 %v581, %v582
    %v584 = vrot.slane %v583, 2
    %v585 = vadd.f32 %v583, %v584
    %v586 = vrot.slane %v585, 1
    %v587 = vadd.f32 %v585, %v586
    %v588 = vmul.f32 %v505, %v400
    %v589 = vmul.f32 %v510, %v405
    %v590 = vmul.f32 %v515, %v410
    %v591 = vmul.f32 %v520, %v415
    %v592 = vadd.f32 %v588, %v589
    %v593 = vadd.f32 %v592, %v590
    %v594 = vadd.f32 %v593, %v591
    %v595 = vrot.slane %v594, 4
    %v596 = vadd.f32 %v594, %v595
    %v597 = vrot.slane %v596, 2
    %v598 = vadd.f32 %v596, %v597
    %v599 = vrot.slane %v598, 1
    %v600 = vadd.f32 %v598, %v599
    %v601 = vmax.f32 %v535, 1e-24
    %v602 = vrsqrt.pop %v601
    %v603 = vmax.f32 %v548, 1e-24
    %v604 = vrsqrt.pop %v603
    %v605 = vmax.f32 %v561, 1e-24
    %v606 = vrsqrt.pop %v605
    %v607 = vmax.f32 %v574, 1e-24
    %v608 = vrsqrt.pop %v607
    %v609 = vsub.f32 0.0, %v602
    %v610 = vsub.f32 0.0, %v606
    %v611 = vmul.f32 %v600, %v604
    %v612 = vmul.f32 %v587, %v602
    %v613 = vsub.f32 %v611, %v612
    %v614 = vsub.f32 0.0, %v613
    %v615 = vmul.f32 %v608, %v608
    %v616 = vmul.f32 %v614, %v615
    %v617 = vmul.f32 %v400, %v604
    %v618 = vmul.f32 %v405, %v604
    %v619 = vmul.f32 %v410, %v604
    %v620 = vmul.f32 %v415, %v604
    %v621 = vmul.f32 %v315, %v609
    %v622 = vmul.f32 %v320, %v609
    %v623 = vmul.f32 %v325, %v609
    %v624 = vmul.f32 %v330, %v609
    %v625 = vadd.f32 %v617, %v621
    %v626 = vadd.f32 %v618, %v622
    %v627 = vadd.f32 %v619, %v623
    %v628 = vadd.f32 %v620, %v624
    %v629 = vmul.f32 %v485, %v610
    %v630 = vmul.f32 %v490, %v610
    %v631 = vmul.f32 %v495, %v610
    %v632 = vmul.f32 %v500, %v610
    %v633 = vadd.f32 %v625, %v629
    %v634 = vadd.f32 %v626, %v630
    %v635 = vadd.f32 %v627, %v631
    %v636 = vadd.f32 %v628, %v632
    %v637 = vmul.f32 %v505, %v616
    %v638 = vmul.f32 %v510, %v616
    %v639 = vmul.f32 %v515, %v616
    %v640 = vmul.f32 %v520, %v616
    %v641 = vadd.f32 %v633, %v637
    %v642 = vadd.f32 %v634, %v638
    %v643 = vadd.f32 %v635, %v639
    %v644 = vadd.f32 %v636, %v640
    %v645 = vand.u32 2147483647, %v641
    %v646 = vand.u32 2147483647, %v642
    %v647 = vand.u32 2147483647, %v643
    %v648 = vand.u32 2147483647, %v644
    %v649 = vadd.f32 %v645, %v646
    %v650 = vadd.f32 %v649, %v647
    %v651 = vadd.f32 %v650, %v648
    %v652 = vrot.slane %v651, 4
    %v653 = vadd.f32 %v651, %v652
    %v654 = vrot.slane %v653, 2
    %v655 = vadd.f32 %v653, %v654
    %v656 = vrot.slane %v655, 1
    %v657 = vadd.f32 %v655, %v656
    %658 = vst [vmem:[#allocation8] sm:$0x1] %v657
    // Predicated region
    $region34: #{tpu_custom_call.1} parent=1 // pred_check
      _
    $region35: #{tpu_custom_call.1} parent=1 // pred_check_branch
      %660 = sbr.rel (0) target = $region37
    $region36: #{tpu_custom_call.1} parent=1 // pred_region
      %s662 = ssub.s32 16, 16
      %663 = vsyncadd [#allocation4], %s662
      %s665 = sshll.u32 [#allocation8], 4
      %s666 = int_to_ptr.vmem [resolvable:$true] %s665
      %668 = dma.vmem_to_hbm [thread:$0]  %s666, 16, %s5, [#allocation4]
    $region37: #{tpu_custom_call.1} parent=1 // pred_fallthru
      _
    // Predicated region
    $region38: #{tpu_custom_call.1} parent=1 // pred_check
      _
    $region39: #{tpu_custom_call.1} parent=1 // pred_check_branch
      %670 = sbr.rel (0) target = $region41
    $region40: #{tpu_custom_call.1} parent=1 // pred_region
      %671 = dma.done [#allocation4], 16
    $region41: #{tpu_custom_call.1} parent=1 // pred_fallthru
      _
    %672 = vsyncpa [#allocation3], 1
    %673 = vsyncpa [#allocation6], 1
    %674 = vsyncpa [#allocation4], 1

</llo_original>
